<compile_context>
chip_gen: v7x
topology: tpu7x:2x2x1
jax: 0.10.0
libtpu: 0.0.40
codegen_flags: <defaults>
</compile_context>

<pallas_src>
import functools

import jax
import jax.numpy as jnp
from jax.experimental import pallas as pl
from jax.experimental.pallas import tpu as pltpu


def bn_ac_conv_kernel(x_ref, bn_ref, w_ref, o_ref, *, use_bf16_mxu):
    # x_ref : (C_in, tile_s) native dtype    bn_ref : (2, C_in, 1) f32
    # w_ref : (tile_co, C_in) native dtype   o_ref  : (tile_co, tile_s)
    scale = bn_ref[0]                                   # (C_in, 1), lane-bcast
    shift = bn_ref[1]
    x = x_ref[...].astype(jnp.float32)                  # upcast in-register
    h = jnp.maximum(x * scale + shift, 0.0)             # eval-mode BN + ReLU
    w = w_ref[...]
    if use_bf16_mxu:
        # Compute-bound regime (large C_in/C_out): bf16 MXU operands, f32 acc.
        h = h.astype(jnp.bfloat16)
        w = w.astype(jnp.bfloat16)
    else:
        w = w.astype(jnp.float32)
    o_ref[...] = jnp.dot(
        w, h, preferred_element_type=jnp.float32
    ).astype(o_ref.dtype)                               # (tile_co, tile_s)


def _vmem_capacity_bytes():
    try:
        return int(pltpu.get_tpu_info().vmem_capacity_bytes)
    except Exception:
        return 64 * 1024 * 1024            # conservative (v7x TensorCore)


def bn_ac_conv3d(x, gamma, beta, running_mean, running_var, conv_w,
                 *, eps=1e-5, out_dtype=None):
    """x: (N, C_in, T, H, W); conv_w: (C_out, C_in, 1, 1, 1).

    Returns (N, C_out, T, H, W) — eval-mode BN -> ReLU -> 1x1x1 Conv3d, same as
    the PyTorch module with its default arguments (eval mode).
    """
    N, C_in, T, H, W = x.shape
    C_out = conv_w.shape[0]
    assert conv_w.shape == (C_out, C_in, 1, 1, 1), (
        "only the module-default pointwise (1,1,1) conv, stride 1, groups=1, "
        "no bias is supported")

    out_dtype = x.dtype if out_dtype is None else jnp.dtype(out_dtype)
    S = T * H * W
    S_pad = pl.cdiv(S, 128) * 128

    x_el = jnp.dtype(x.dtype).itemsize
    w_el = jnp.dtype(conv_w.dtype).itemsize
    o_el = jnp.dtype(out_dtype).itemsize

    # --- output-channel tiling: keep big weight / out blocks inside VMEM -----
    tile_co = C_out
    while tile_co > 8 and tile_co * C_in * w_el > 8 * 1024 * 1024:
        tile_co = max(8, ((tile_co // 2) // 8) * 8)
    num_co_blocks = pl.cdiv(C_out, tile_co)

    # --- generation-aware VMEM budget -----------------------------------------
    phys_vmem = _vmem_capacity_bytes()
    if phys_vmem <= 64 * 1024 * 1024:        # v7x: 64 MiB per TensorCore
        tile_budget = 40 * 1024 * 1024
        vmem_cap = 48 * 1024 * 1024
    else:                                    # v5e / v6e: 128 MiB
        tile_budget = 64 * 1024 * 1024
        vmem_cap = 96 * 1024 * 1024

    def vmem_bytes(ts):
        return (2 * C_in * ts * x_el             # double-buffered x tile
                + 2 * tile_co * ts * o_el        # double-buffered out tile
                + 2 * tile_co * C_in * w_el      # conv-weight block (worst case)
                + 2 * 2 * C_in * 4)              # BN scale/shift

    # --- spatial tile: DMA-byte driven (amortize per-step pipeline overhead) --
    target_step_bytes = 3 * 1024 * 1024
    per_lane_bytes = C_in * x_el + tile_co * o_el
    tile_s = 128
    while (tile_s < S_pad
           and per_lane_bytes * tile_s < target_step_bytes
           and vmem_bytes(2 * tile_s) <= tile_budget):
        tile_s *= 2
    tile_s = min(tile_s, S_pad)
    while vmem_bytes(tile_s) > tile_budget and tile_s > 128:
        tile_s = max(128, ((tile_s // 2) // 128) * 128)
    num_s_blocks = pl.cdiv(S, tile_s)        # ragged last block handled by pipeline

    # --- megacore (v7x): make sure both TensorCores get work ------------------
    if N * num_co_blocks * num_s_blocks < 2 and S > 128:
        tile_s = max(128, pl.cdiv(S, 2 * 128) * 128)
        num_s_blocks = pl.cdiv(S, tile_s)

    # --- fold eval-mode BatchNorm (running stats) into a per-channel affine ---
    inv_std = 1.0 / jnp.sqrt(running_var.astype(jnp.float32) + eps)
    scale = gamma.astype(jnp.float32) * inv_std
    shift = beta.astype(jnp.float32) - running_mean.astype(jnp.float32) * scale
    bn_params = jnp.stack([scale, shift]).reshape(2, C_in, 1)

    # Free channel-first reshapes, native dtype (no wrapper-side cast pass).
    x3d = x.reshape(N, C_in, S)
    w2d = conv_w.reshape(C_out, C_in)

    use_bf16_mxu = min(C_in, C_out) >= 256
    kernel = functools.partial(bn_ac_conv_kernel, use_bf16_mxu=use_bf16_mxu)

    working_set = vmem_bytes(tile_s)
    vmem_limit = int(min(max(working_set + (4 << 20), 32 << 20), vmem_cap))

    cost = pl.CostEstimate(
        flops=2 * N * S * C_in * C_out,
        bytes_accessed=(N * S * C_in * x_el + N * S * C_out * o_el
                        + C_out * C_in * w_el + 2 * C_in * 4),
        transcendentals=0)

    grid = (N, num_co_blocks, num_s_blocks)

    def run(single_buffer):
        # Grid-invariant operands need no double buffer: single-buffering them
        # frees VMEM headroom (matters most on v7x's 64 MiB VMEM).
        inv = dict(pipeline_mode=pl.Buffered(1)) if single_buffer else {}
        w_kwargs = inv if num_co_blocks == 1 else {}
        in_specs = [
            # x tile: batch squeezed, channels on sublanes, spatial on lanes.
            pl.BlockSpec((None, C_in, tile_s), lambda n, co, j: (n, 0, j)),
            # grid-invariant BN affine (scale, shift).
            pl.BlockSpec((2, C_in, 1), lambda n, co, j: (0, 0, 0), **inv),
            # pointwise conv weight, optionally tiled along C_out.
            pl.BlockSpec((tile_co, C_in), lambda n, co, j: (co, 0), **w_kwargs),
        ]
        out_specs = pl.BlockSpec((None, tile_co, tile_s),
                                 lambda n, co, j: (n, co, j))
        return pl.pallas_call(
            kernel,
            out_shape=jax.ShapeDtypeStruct((N, C_out, S), out_dtype),
            grid_spec=pltpu.PrefetchScalarGridSpec(
                num_scalar_prefetch=0,
                grid=grid,
                in_specs=in_specs,
                out_specs=out_specs),
            compiler_params=pltpu.CompilerParams(
                dimension_semantics=("parallel", "parallel", "parallel"),
                vmem_limit_bytes=vmem_limit),
            cost_estimate=cost,
        )(x3d, bn_params, w2d)

    try:
        out3d = run(single_buffer=True)
    except Exception:
        # Fallback if this jax build rejects pl.Buffered(1) for these specs.
        out3d = run(single_buffer=False)

    return out3d.reshape(N, C_out, T, H, W)


def reference(x, gamma, beta, rm, rv, conv_w, eps=1e-5):
    """Pure-JAX reference: eval-mode BN -> ReLU -> 1x1x1 Conv3d (NCDHW)."""
    c = x.shape[1]
    b = (1, c, 1, 1, 1)
    xn = (x - rm.reshape(b)) / jnp.sqrt(rv.reshape(b) + eps)
    h = jnp.maximum(xn * gamma.reshape(b) + beta.reshape(b), 0.0)
    w2 = conv_w.reshape(conv_w.shape[0], conv_w.shape[1])   # (C_out, C_in)
    return jnp.einsum("ncthw,oc->nothw", h, w2)


if __name__ == "__main__":
    # Small shapes consistent with the module: batch=2, C_in=8, T=4, H=W=8, C_out=16.
    N, C_in, T, H, W = 2, 8, 4, 8, 8
    C_out = 16

    key = jax.random.PRNGKey(0)
    kx, kw, kg, kb, km, kv = jax.random.split(key, 6)

    x = jax.random.normal(kx, (N, C_in, T, H, W), dtype=jnp.float32)

    # Deterministic synthetic parameters (module __init__ shapes).
    conv_w = jax.random.normal(kw, (C_out, C_in, 1, 1, 1), dtype=jnp.float32) * 0.1
    gamma = 1.0 + 0.1 * jax.random.normal(kg, (C_in,), dtype=jnp.float32)
    beta = 0.1 * jax.random.normal(kb, (C_in,), dtype=jnp.float32)
    running_mean = 0.1 * jax.random.normal(km, (C_in,), dtype=jnp.float32)
    running_var = 1.0 + 0.1 * jax.random.uniform(kv, (C_in,), dtype=jnp.float32)

    out = bn_ac_conv3d(x, gamma, beta, running_mean, running_var, conv_w)
    out = jax.block_until_ready(out)

    ref = reference(x, gamma, beta, running_mean, running_var, conv_w)
    assert out.shape == (N, C_out, T, H, W)
    assert jnp.allclose(out, ref, atol=1e-4, rtol=1e-4), "mismatch vs reference"

    print("KERNEL_OK")
</pallas_src>

<mosaic_0001>
module attributes {stable_mosaic.version = 11 : i64} {
  func.func @bn_ac_conv_kernel(%arg0: i32, %arg1: i32, %arg2: i32, %arg3: memref<1x8x256xf32, #tpu.memory_space<vmem>>, %arg4: memref<2x8x1xf32, #tpu.memory_space<vmem>>, %arg5: memref<16x8xf32, #tpu.memory_space<vmem>>, %arg6: memref<1x16x256xf32, #tpu.memory_space<vmem>>) attributes {dimension_semantics = [#tpu.dimension_semantics<parallel>, #tpu.dimension_semantics<parallel>, #tpu.dimension_semantics<parallel>], iteration_bounds = array<i64: 2, 1, 1>, scalar_prefetch = 0 : i64, scratch_operands = 0 : i64, tpu.core_type = #tpu.core_type<tc>, window_params = [{transform_indices = @transform_0, window_bounds = array<i64: 1, 8, 256>}, {pipeline_mode = #tpu.pipeline_mode<synchronous>, transform_indices = @transform_1, window_bounds = array<i64: 2, 8, 1>}, {pipeline_mode = #tpu.pipeline_mode<synchronous>, transform_indices = @transform_2, window_bounds = array<i64: 16, 8>}, {transform_indices = @transform_3, window_bounds = array<i64: 1, 16, 256>}]} {
    %c0 = arith.constant 0 : index
    %c0_0 = arith.constant 0 : index
    %c0_1 = arith.constant 0 : index
    %0 = vector.load %arg4[%c0, %c0_0, %c0_1] : memref<2x8x1xf32, #tpu.memory_space<vmem>>, vector<1x8x1xf32>
    %1 = vector.shape_cast %0 : vector<1x8x1xf32> to vector<8x1xf32>
    %c1 = arith.constant 1 : index
    %c0_2 = arith.constant 0 : index
    %c0_3 = arith.constant 0 : index
    %2 = vector.load %arg4[%c1, %c0_2, %c0_3] : memref<2x8x1xf32, #tpu.memory_space<vmem>>, vector<1x8x1xf32>
    %3 = vector.shape_cast %2 : vector<1x8x1xf32> to vector<8x1xf32>
    %c0_4 = arith.constant 0 : index
    %c0_5 = arith.constant 0 : index
    %c0_6 = arith.constant 0 : index
    %4 = vector.load %arg3[%c0_4, %c0_5, %c0_6] : memref<1x8x256xf32, #tpu.memory_space<vmem>>, vector<1x8x256xf32>
    %5 = vector.shape_cast %4 : vector<1x8x256xf32> to vector<8x256xf32>
    %6 = vector.broadcast %1 : vector<8x1xf32> to vector<8x256xf32>
    %7 = arith.mulf %5, %6 : vector<8x256xf32>
    %8 = vector.broadcast %3 : vector<8x1xf32> to vector<8x256xf32>
    %9 = arith.addf %7, %8 : vector<8x256xf32>
    %cst = arith.constant 0.000000e+00 : f32
    %10 = vector.broadcast %cst : f32 to vector<8x256xf32>
    %11 = arith.maximumf %9, %10 : vector<8x256xf32>
    %c0_7 = arith.constant 0 : index
    %c0_8 = arith.constant 0 : index
    %12 = vector.load %arg5[%c0_7, %c0_8] : memref<16x8xf32, #tpu.memory_space<vmem>>, vector<16x8xf32>
    %cst_9 = arith.constant dense<0.000000e+00> : vector<16x256xf32>
    %13 = tpu.matmul %12, %11, %cst_9 {dimension_numbers = #tpu.dot_dimension_numbers<[1], [0], [0], [1], [0, 0, 1, 1], [], []>} : vector<16x8xf32>, vector<8x256xf32>, vector<16x256xf32> -> vector<16x256xf32>
    %c0_10 = arith.constant 0 : index
    %c0_11 = arith.constant 0 : index
    %c0_12 = arith.constant 0 : index
    %14 = vector.load %arg6[%c0_10, %c0_11, %c0_12] : memref<1x16x256xf32, #tpu.memory_space<vmem>>, vector<1x16x256xf32>
    %15 = vector.shape_cast %14 : vector<1x16x256xf32> to vector<16x256xf32>
    %16 = vector.shape_cast %13 : vector<16x256xf32> to vector<1x16x256xf32>
    tpu.vector_store %arg6[%c0_10, %c0_11, %c0_12], %16 {strides = array<i32>} : memref<1x16x256xf32, #tpu.memory_space<vmem>>, vector<1x16x256xf32>,
    return
  }
  func.func @transform_0(%arg0: i32, %arg1: i32, %arg2: i32) -> (i32, i32, i32) {
    %c0_i32 = arith.constant 0 : i32
    %c0_i32_0 = arith.constant 0 : i32
    return %arg0, %c0_i32, %arg2 : i32, i32, i32
  }
  func.func @transform_1(%arg0: i32, %arg1: i32, %arg2: i32) -> (i32, i32, i32) {
    %c0_i32 = arith.constant 0 : i32
    %c0_i32_0 = arith.constant 0 : i32
    %c0_i32_1 = arith.constant 0 : i32
    %c0_i32_2 = arith.constant 0 : i32
    return %c0_i32, %c0_i32_0, %c0_i32_1 : i32, i32, i32
  }
  func.func @transform_2(%arg0: i32, %arg1: i32, %arg2: i32) -> (i32, i32) {
    %c0_i32 = arith.constant 0 : i32
    %c0_i32_0 = arith.constant 0 : i32
    return %arg1, %c0_i32 : i32, i32
  }
  func.func @transform_3(%arg0: i32, %arg1: i32, %arg2: i32) -> (i32, i32, i32) {
    %c0_i32 = arith.constant 0 : i32
    return %arg0, %arg1, %arg2 : i32, i32, i32
  }
}

module attributes {stable_mosaic.version = 11 : i64} {
  func.func @bn_ac_conv_kernel(%arg0: i32, %arg1: i32, %arg2: i32, %arg3: memref<1x8x256xf32, #tpu.memory_space<vmem>>, %arg4: memref<2x8x1xf32, #tpu.memory_space<vmem>>, %arg5: memref<16x8xf32, #tpu.memory_space<vmem>>, %arg6: memref<1x16x256xf32, #tpu.memory_space<vmem>>) attributes {dimension_semantics = [#tpu.dimension_semantics<parallel>, #tpu.dimension_semantics<parallel>, #tpu.dimension_semantics<parallel>], iteration_bounds = array<i64: 2, 1, 1>, scalar_prefetch = 0 : i64, scratch_operands = 0 : i64, tpu.core_type = #tpu.core_type<tc>, window_params = [{transform_indices = @transform_0, window_bounds = array<i64: 1, 8, 256>}, {pipeline_mode = #tpu.pipeline_mode<synchronous>, transform_indices = @transform_1, window_bounds = array<i64: 2, 8, 1>}, {transform_indices = @transform_2, window_bounds = array<i64: 16, 8>}, {transform_indices = @transform_3, window_bounds = array<i64: 1, 16, 256>}]} {
    %c0 = arith.constant 0 : index
    %c0_0 = arith.constant 0 : index
    %c0_1 = arith.constant 0 : index
    %0 = vector.load %arg4[%c0, %c0_0, %c0_1] : memref<2x8x1xf32, #tpu.memory_space<vmem>>, vector<1x8x1xf32>
    %1 = vector.shape_cast %0 : vector<1x8x1xf32> to vector<8x1xf32>
    %c1 = arith.constant 1 : index
    %c0_2 = arith.constant 0 : index
    %c0_3 = arith.constant 0 : index
    %2 = vector.load %arg4[%c1, %c0_2, %c0_3] : memref<2x8x1xf32, #tpu.memory_space<vmem>>, vector<1x8x1xf32>
    %3 = vector.shape_cast %2 : vector<1x8x1xf32> to vector<8x1xf32>
    %c0_4 = arith.constant 0 : index
    %c0_5 = arith.constant 0 : index
    %c0_6 = arith.constant 0 : index
    %4 = vector.load %arg3[%c0_4, %c0_5, %c0_6] : memref<1x8x256xf32, #tpu.memory_space<vmem>>, vector<1x8x256xf32>
    %5 = vector.shape_cast %4 : vector<1x8x256xf32> to vector<8x256xf32>
    %6 = vector.broadcast %1 : vector<8x1xf32> to vector<8x256xf32>
    %7 = arith.mulf %5, %6 : vector<8x256xf32>
    %8 = vector.broadcast %3 : vector<8x1xf32> to vector<8x256xf32>
    %9 = arith.addf %7, %8 : vector<8x256xf32>
    %cst = arith.constant 0.000000e+00 : f32
    %10 = vector.broadcast %cst : f32 to vector<8x256xf32>
    %11 = arith.maximumf %9, %10 : vector<8x256xf32>
    %c0_7 = arith.constant 0 : index
    %c0_8 = arith.constant 0 : index
    %12 = vector.load %arg5[%c0_7, %c0_8] : memref<16x8xf32, #tpu.memory_space<vmem>>, vector<16x8xf32>
    %cst_9 = arith.constant dense<0.000000e+00> : vector<16x256xf32>
    %13 = tpu.matmul %12, %11, %cst_9 {dimension_numbers = #tpu.dot_dimension_numbers<[1], [0], [0], [1], [0, 0, 1, 1], [], []>} : vector<16x8xf32>, vector<8x256xf32>, vector<16x256xf32> -> vector<16x256xf32>
    %c0_10 = arith.constant 0 : index
    %c0_11 = arith.constant 0 : index
    %c0_12 = arith.constant 0 : index
    %14 = vector.load %arg6[%c0_10, %c0_11, %c0_12] : memref<1x16x256xf32, #tpu.memory_space<vmem>>, vector<1x16x256xf32>
    %15 = vector.shape_cast %14 : vector<1x16x256xf32> to vector<16x256xf32>
    %16 = vector.shape_cast %13 : vector<16x256xf32> to vector<1x16x256xf32>
    tpu.vector_store %arg6[%c0_10, %c0_11, %c0_12], %16 {strides = array<i32>} : memref<1x16x256xf32, #tpu.memory_space<vmem>>, vector<1x16x256xf32>,
    return
  }
  func.func @transform_0(%arg0: i32, %arg1: i32, %arg2: i32) -> (i32, i32, i32) {
    %c0_i32 = arith.constant 0 : i32
    %c0_i32_0 = arith.constant 0 : i32
    return %arg0, %c0_i32, %arg2 : i32, i32, i32
  }
  func.func @transform_1(%arg0: i32, %arg1: i32, %arg2: i32) -> (i32, i32, i32) {
    %c0_i32 = arith.constant 0 : i32
    %c0_i32_0 = arith.constant 0 : i32
    %c0_i32_1 = arith.constant 0 : i32
    %c0_i32_2 = arith.constant 0 : i32
    return %c0_i32, %c0_i32_0, %c0_i32_1 : i32, i32, i32
  }
  func.func @transform_2(%arg0: i32, %arg1: i32, %arg2: i32) -> (i32, i32) {
    %c0_i32 = arith.constant 0 : i32
    %c0_i32_0 = arith.constant 0 : i32
    return %arg1, %c0_i32 : i32, i32
  }
  func.func @transform_3(%arg0: i32, %arg1: i32, %arg2: i32) -> (i32, i32, i32) {
    %c0_i32 = arith.constant 0 : i32
    return %arg0, %arg1, %arg2 : i32, i32, i32
  }
}

</mosaic_0001>

<llo_original>
// kernel: tpu_custom_call.1
$region0: #{tpu_custom_call.1}
  #allocation0 [shape = 'u32[]', space=smem, size = 0x4, offset = 0x4, fixed_abs, tag = 'smem constant byte address 0x4 - core index']
  #allocation1 [shape = 'u32[144,128]{1,0:T(1,128)}', space=vmem, size = 0x12000, scoped, tag = 'internal scratch']
  %s0 = inlined_call_operand.vmem [shape: f32[2,8,256], index: 0, kind: input, shape index: {}]
  %s1 = inlined_call_operand.vmem [shape: f32[2,8,1], index: 1, kind: input, shape index: {}]
  %s2 = inlined_call_operand.vmem [shape: f32[16,8], index: 2, kind: input, shape index: {}]
  %s3 = inlined_call_operand.hbm [shape: f32[2,16,256], index: 3, kind: output, shape index: {}]
  %s4 = sld [smem:[#allocation0]]
  $region45: #{tpu_custom_call.1} parent=0
    _
  %s6 = ssub.s32 1, %s4
  %s7 = scalar_select 0, %s6, %s4
  $region1: #{tpu_custom_call.1} parent=0
    #allocation2 [shape = 'u8[32768]{0}', space=vmem, size = 0x8000, scoped, tag = 'output window, operand 0']
    #allocation3 [shape = 's32[2]{0}', space=sflag, size = 0x8, scoped, tag = 'scoped memory for tpu_custom_call.1']
    %8 = vsyncpa [#allocation3], 0
    %s9 = scalar_lea.sflag [#allocation3], 1
    %10 = vsyncpa %s9, 0
    loop: start=0, step=1, limit=4
    $region2: #{tpu_custom_call.1} parent=1 // loop_pre_header
      _
    $region3: #{tpu_custom_call.1} parent=1 // loop_header
      %s12 = sphi 0, %s16
      %p13 = scmp.ge.s32.totalorder %s12, 4
      %s19 = sphi 0, %s38
      %s20 = sphi 0, %s34
      %s21 = sphi 0, %s30
      %s22 = sphi 0, %s19
      %s23 = sphi 0, %s20
      %s24 = sphi 0, %s21
      %s25 = sphi 0, %s22
      %s26 = sphi 0, %s23
      %s27 = sphi 0, %s24
      %s43 = sphi 0, %s45
      %s46 = sphi 0, %s43
      %s47 = sphi 0, %s46
      %s63 = sphi 0, %s47
      %s67 = sphi 0, %s67
      %s69 = sphi 0, %s67
      %s70 = sphi 0, %s69
      %s84 = sphi 0, %s70
      %s90 = sphi 0, %s92
      %s93 = sphi 0, %s90
      %s94 = sphi 0, %s93
      %s110 = sphi 0, %s94
      %s120 = sphi 0, %s122
      %s123 = sphi 0, %s120
      %s124 = sphi 0, %s123
      %s140 = sphi 0, %s124
    $region4: #{tpu_custom_call.1} parent=1 // loop_header_branch
      %15 = sbr.rel (%p13) target = $region8
    $region5: #{tpu_custom_call.1} parent=1 // loop_body
      %s17 = ssub.s32 %s12, 1
      %s18 = ssub.s32 %s12, 2
      %s28 = sadd.s32 1, %s21
      %p29 = scmp.ge.s32.totalorder %s28, 1
      %s30 = scalar_select %p29, 0, %s28
      %s31 = sadd.s32 1, %s20
      %s32 = scalar_select %p29, %s31, %s20
      %p33 = scmp.ge.s32.totalorder %s32, 1
      %s34 = scalar_select %p33, 0, %s32
      %s35 = sadd.s32 1, %s19
      %s36 = scalar_select %p33, %s35, %s19
      %p37 = scmp.ge.s32.totalorder %s36, 2
      %s38 = scalar_select %p37, 0, %s36
      %s39 = ssub.s32 %s19, %s38
      %s40 = ssub.s32 %s21, %s30
      %s41 = sor.u32 %s39, %s40
      %p42 = scmp.eq.s32.totalorder %s41, 0
      %s44 = sadd.s32 %s43, 1
      %s45 = scalar_select %p42, %s43, %s44
      %p48 = pneg %p42
      %p49 = scmp.eq.s32.totalorder %s12, 1
      %p50 = por %p48, %p49
      %p51 = scmp.ne.s32.totalorder %s43, %s46
      %p52 = scmp.eq.s32.totalorder %s12, 0
      %p53 = por %p51, %p52
      %p54 = scmp.ne.s32.totalorder %s43, %s46
      %p55 = scmp.eq.s32.totalorder %s17, 1
      %p56 = por %p54, %p55
      %p57 = scmp.ne.s32.totalorder %s46, %s47
      %p58 = scmp.eq.s32.totalorder %s17, 0
      %p59 = por %p57, %p58
      %p60 = scmp.ne.s32.totalorder %s46, %s47
      %p61 = scmp.eq.s32.totalorder %s18, 1
      %p62 = por %p60, %p61
      %p64 = scmp.ne.s32.totalorder %s47, %s63
      %p65 = scmp.eq.s32.totalorder %s18, 0
      %p66 = por %p64, %p65
      %s68 = sadd.s32 %s67, 1
      %p71 = scmp.eq.s32.totalorder %s12, 1
      %p72 = scmp.ne.s32.totalorder %s67, %s69
      %p73 = scmp.eq.s32.totalorder %s12, 0
      %p74 = por %p72, %p73
      %p75 = scmp.ne.s32.totalorder %s67, %s69
      %p76 = scmp.eq.s32.totalorder %s17, 1
      %p77 = por %p75, %p76
      %p78 = scmp.ne.s32.totalorder %s69, %s70
      %p79 = scmp.eq.s32.totalorder %s17, 0
      %p80 = por %p78, %p79
      %p81 = scmp.ne.s32.totalorder %s69, %s70
      %p82 = scmp.eq.s32.totalorder %s18, 1
      %p83 = por %p81, %p82
      %p85 = scmp.ne.s32.totalorder %s70, %s84
      %p86 = scmp.eq.s32.totalorder %s18, 0
      %p87 = por %p85, %p86
      %s88 = ssub.s32 %s20, %s34
      %p89 = scmp.eq.s32.totalorder %s88, 0
      %s91 = sadd.s32 %s90, 1
      %s92 = scalar_select %p89, %s90, %s91
      %p95 = pneg %p89
      %p96 = scmp.eq.s32.totalorder %s12, 1
      %p97 = por %p95, %p96
      %p98 = scmp.ne.s32.totalorder %s90, %s93
      %p99 = scmp.eq.s32.totalorder %s12, 0
      %p100 = por %p98, %p99
      %p101 = scmp.ne.s32.totalorder %s90, %s93
      %p102 = scmp.eq.s32.totalorder %s17, 1
      %p103 = por %p101, %p102
      %p104 = scmp.ne.s32.totalorder %s93, %s94
      %p105 = scmp.eq.s32.totalorder %s17, 0
      %p106 = por %p104, %p105
      %p107 = scmp.ne.s32.totalorder %s93, %s94
      %p108 = scmp.eq.s32.totalorder %s18, 1
      %p109 = por %p107, %p108
      %p111 = scmp.ne.s32.totalorder %s94, %s110
      %p112 = scmp.eq.s32.totalorder %s18, 0
      %p113 = por %p111, %p112
      %s114 = ssub.s32 %s19, %s38
      %s115 = ssub.s32 %s20, %s34
      %s116 = sor.u32 %s114, %s115
      %s117 = ssub.s32 %s21, %s30
      %s118 = sor.u32 %s116, %s117
      %p119 = scmp.eq.s32.totalorder %s118, 0
      %s121 = sadd.s32 %s120, 1
      %s122 = scalar_select %p119, %s120, %s121
      %p125 = pneg %p119
      %p126 = scmp.eq.s32.totalorder %s12, 1
      %p127 = por %p125, %p126
      %p128 = scmp.ne.s32.totalorder %s120, %s123
      %p129 = scmp.eq.s32.totalorder %s12, 0
      %p130 = por %p128, %p129
      %p131 = scmp.ne.s32.totalorder %s120, %s123
      %p132 = scmp.eq.s32.totalorder %s17, 1
      %p133 = por %p131, %p132
      %p134 = scmp.ne.s32.totalorder %s123, %s124
      %p135 = scmp.eq.s32.totalorder %s17, 0
      %p136 = por %p134, %p135
      %p137 = scmp.ne.s32.totalorder %s123, %s124
      %p138 = scmp.eq.s32.totalorder %s18, 1
      %p139 = por %p137, %p138
      %p141 = scmp.ne.s32.totalorder %s124, %s140
      %p142 = scmp.eq.s32.totalorder %s18, 0
      %p143 = por %p141, %p142
      %p144 = scmp.le.s32.totalorder 1, %s12
      %p145 = scmp.lt.s32.totalorder %s12, 3
      %p146 = pnand %p144, %p145
      %p147 = pneg %p146
      // Predicated region
      $region9: #{tpu_custom_call.1} parent=5 // pred_check
        _
      $region10: #{tpu_custom_call.1} parent=5 // pred_check_branch
        %149 = sbr.rel (%p146) target = $region12
      $region11: #{tpu_custom_call.1} parent=5 // pred_region
        %s150 = ssub.s32 %s12, 1
        // Predicated region
        $region13: #{tpu_custom_call.1} parent=11 // pred_check
          %p151 = pneg %p80
        $region14: #{tpu_custom_call.1} parent=11 // pred_check_branch
          %153 = sbr.rel (%p151) target = $region16
        $region15: #{tpu_custom_call.1} parent=11 // pred_region
          _
        $region16: #{tpu_custom_call.1} parent=11 // pred_fallthru
          _
        // Predicated region
        $region17: #{tpu_custom_call.1} parent=11 // pred_check
          %p154 = pneg %p106
        $region18: #{tpu_custom_call.1} parent=11 // pred_check_branch
          %156 = sbr.rel (%p154) target = $region20
        $region19: #{tpu_custom_call.1} parent=11 // pred_region
          %s157 = smul.u32 2, %s23
          %p158 = scmp.lt.s32.totalorder %s157, 1
          %s159 = scalar_select %p158, %s157, 1
          %s160 = smul.addr %s159, 8
          %s161 = scalar_lea.vmem %s2, %s160
          %s162 = smul.u32 2, %s23
        $region20: #{tpu_custom_call.1} parent=11 // pred_fallthru
          _
      $region12: #{tpu_custom_call.1} parent=5 // pred_fallthru
        _
      %p163 = scmp.lt.s32.totalorder %s12, 2
      // Predicated region
      $region21: #{tpu_custom_call.1} parent=5 // pred_check
        %p164 = pneg %p163
      $region22: #{tpu_custom_call.1} parent=5 // pred_check_branch
        %166 = sbr.rel (%p164) target = $region24
      $region23: #{tpu_custom_call.1} parent=5 // pred_region
        // Predicated region
        $region25: #{tpu_custom_call.1} parent=23 // pred_check
          %p167 = pneg %p53
        $region26: #{tpu_custom_call.1} parent=23 // pred_check_branch
          %169 = sbr.rel (%p167) target = $region28
        $region27: #{tpu_custom_call.1} parent=23 // pred_region
          %s170 = smul.u32 2, %s21
          %p171 = scmp.lt.s32.totalorder %s19, 1
          %s172 = scalar_select %p171, %s19, 1
          %p173 = scmp.lt.s32.totalorder %s170, 1
          %s174 = scalar_select %p173, %s170, 1
          %s175 = smul.addr %s172, 2
          %s176 = sadd.s32 %s174, %s175
          %s177 = smul.addr %s176, 8
          %s178 = scalar_lea.vmem %s0, %s177
          %s179 = smul.u32 2, %s21
        $region28: #{tpu_custom_call.1} parent=23 // pred_fallthru
          _
      $region24: #{tpu_custom_call.1} parent=5 // pred_fallthru
        _
      %p180 = scmp.le.s32.totalorder 1, %s12
      %p181 = scmp.lt.s32.totalorder %s12, 3
      %p182 = pnand %p180, %p181
      %p183 = pneg %p182
      // Predicated region
      $region29: #{tpu_custom_call.1} parent=5 // pred_check
        _
      $region30: #{tpu_custom_call.1} parent=5 // pred_check_branch
        %185 = sbr.rel (%p182) target = $region32
      $region31: #{tpu_custom_call.1} parent=5 // pred_region
        %s186 = ssub.s32 %s12, 1
        %s187 = smul.u32 2, %s24
        %p188 = scmp.lt.s32.totalorder %s22, 1
        %s189 = scalar_select %p188, %s22, 1
        %p190 = scmp.lt.s32.totalorder %s187, 1
        %s191 = scalar_select %p190, %s187, 1
        %s192 = smul.addr %s189, 2
        %s193 = sadd.s32 %s191, %s192
        %s194 = smul.addr %s193, 8
        %s195 = scalar_lea.vmem %s0, %s194
        %p196 = pneg %p59
        %p197 = pneg %p56
        %p198 = pneg %p80
        %p199 = pneg %p77
        %s200 = smul.u32 2, %s23
        %p201 = scmp.lt.s32.totalorder %s200, 1
        %s202 = scalar_select %p201, %s200, 1
        %s203 = smul.addr %s202, 8
        %s204 = scalar_lea.vmem %s2, %s203
        %p205 = pneg %p106
        %p206 = pneg %p103
        %p207 = pneg %p136
        %p208 = pneg %p133
        %s209 = sand.u32 %s123, 1
        %s210 = scalar_lea.sflag [#allocation3], %s209
        %s211 = sand.u32 %s123, 1
        %s212 = smul.addr %s211, 32
        %s213 = scalar_lea.vmem [#allocation2], %s212
        %s214 = smul.u32 2, %s24
        %p215 = scmp.lt.s32.totalorder %s22, 1
        %s216 = scalar_select %p215, %s22, 1
        %p217 = scmp.lt.s32.totalorder %s214, 1
        %s218 = scalar_select %p217, %s214, 1
        %s219 = smul.addr %s216, 2
        %s220 = sadd.s32 %s218, %s219
        %s221 = smul.addr %s220, 8
        %s222 = scalar_lea.vmem %s0, %s221
        %s223 = smul.u32 2, %s24
        %s224 = smul.u32 2, %s23
        %p225 = scmp.lt.s32.totalorder %s224, 1
        %s226 = scalar_select %p225, %s224, 1
        %s227 = smul.addr %s226, 8
        %s228 = scalar_lea.vmem %s2, %s227
        %s229 = smul.u32 2, %s23
        %s230 = smul.u32 2, %s23
        %s231 = smul.u32 2, %s24
        %v232 = vld [vmem:[%s1] sm:$0xff]
        %s233 = scalar_lea.vmem %s1, 8
        %v234 = vld [vmem:[%s233] sm:$0xff]
        %v235 = vld [vmem:[%s222] sm:$0xff]
        %v236 = vld [vmem:[%s222 + $0x8] sm:$0xff]
        %238 = vset.pattern.permute.xlu0 0
        %239 = vperm.xlu0 %238, %v232
        %v240 = vpop.permute.xlu0 %239
        %v242 = vmul.f32 %v235, %v240
        %v243 = vmul.f32 %v236, %v240
        %245 = vset.pattern.permute.xlu0 0
        %246 = vperm.xlu0 %245, %v234
        %v247 = vpop.permute.xlu0 %246
        %v249 = vadd.f32 %v242, %v247
        %v250 = vadd.f32 %v243, %v247
        %v251 = vmax.f32 %v249, 0.0
        %v252 = vmax.f32 %v250, 0.0
        %v253 = vld [vmem:[%s228] sm:$0xff]
        %v254 = vld [vmem:[%s228 + $0x8] sm:$0xff]
        %vm255 = vcmask 64512
        %v257 = vsel %vm255, %v253, 0
        %v260 = vsel %vm255, %v254, 0
        %262 = vmatprep.subr.mxu0 %v252
        %263 = vmatpush1.msra.mxu0 %v251
        %264 = vmatprep.subr.mxu0 0.0
        %265 = vmatpush1.msra.mxu0 0.0
        %266 = vmatprep.subr.mxu0 0.0
        %267 = vmatpush1.msra.mxu0 0.0
        %268 = vmatprep.subr.mxu0 0.0
        %269 = vmatpush1.msra.mxu0 0.0
        %270 = vmatprep.subr.mxu0 0.0
        %271 = vmatpush1.msra.mxu0 0.0
        %272 = vmatprep.subr.mxu0 0.0
        %273 = vmatpush1.msra.mxu0 0.0
        %274 = vmatprep.subr.mxu0 0.0
        %275 = vmatpush1.msra.mxu0 0.0
        %276 = vmatprep.subr.mxu0 0.0
        %277 = vmatpush1.msra.mxu0 0.0
        %278 = vmatprep.subr.mxu0 0.0
        %279 = vmatpush1.msra.mxu0 0.0
        %280 = vmatprep.subr.mxu0 0.0
        %281 = vmatpush1.msra.mxu0 0.0
        %282 = vmatprep.subr.mxu0 0.0
        %283 = vmatpush1.msra.mxu0 0.0
        %284 = vmatprep.subr.mxu0 0.0
        %285 = vmatpush1.msra.mxu0 0.0
        %286 = vmatprep.subr.mxu0 0.0
        %287 = vmatpush1.msra.mxu0 0.0
        %288 = vmatprep.subr.mxu0 0.0
        %289 = vmatpush1.msra.mxu0 0.0
        %290 = vmatprep.subr.mxu0 0.0
        %291 = vmatpush1.msra.mxu0 0.0
        %292 = vmatprep.subr.mxu0 0.0
        %293 = vmatpush1.msra.mxu0 0.0
        %294 = vmatprep.subr.mxu0 0.0
        %295 = vmatpush1.msra.mxu0 0.0
        %296 = vmatprep.subr.mxu0 0.0
        %297 = vmatpush1.msra.mxu0 0.0
        %298 = vmatprep.subr.mxu0 0.0
        %299 = vmatpush1.msra.mxu0 0.0
        %300 = vmatprep.subr.mxu0 0.0
        %301 = vmatpush1.msra.mxu0 0.0
        %302 = vmatprep.subr.mxu0 0.0
        %303 = vmatpush1.msra.mxu0 0.0
        %304 = vmatprep.subr.mxu0 0.0
        %305 = vmatpush1.msra.mxu0 0.0
        %306 = vmatprep.subr.mxu0 0.0
        %307 = vmatpush1.msra.mxu0 0.0
        %308 = vmatprep.subr.mxu0 0.0
        %309 = vmatpush1.msra.mxu0 0.0
        %310 = vmatprep.subr.mxu0 0.0
        %311 = vmatpush1.msra.mxu0 0.0
        %312 = vmatprep.subr.mxu0 0.0
        %313 = vmatpush1.msra.mxu0 0.0
        %314 = vmatprep.subr.mxu0 0.0
        %315 = vmatpush1.msra.mxu0 0.0
        %316 = vmatprep.subr.mxu0 0.0
        %317 = vmatpush1.msra.mxu0 0.0
        %318 = vmatprep.subr.mxu0 0.0
        %319 = vmatpush1.msra.mxu0 0.0
        %320 = vmatprep.subr.mxu0 0.0
        %321 = vmatpush1.msra.mxu0 0.0
        %322 = vmatprep.subr.mxu0 0.0
        %323 = vmatpush1.msra.mxu0 0.0
        %324 = vmatprep.subr.mxu0 0.0
        %325 = vmatpush1.msra.mxu0 0.0
        %326 = vmatprep.mubr.f32.mxu0 0.0
        %327 = vmatmul.mubr.f32.gmra.mrb[0].mxu0 %v257
        %v328 = vpop.f32.mrb[0].mxu0
        %v329 = vadd.f32 0.0, %v328
        %v330 = vpop.f32.mrb[0].mxu0
        %v331 = vadd.f32 0.0, %v330
        %332 = vmatprep.mubr.f32.mxu0 0.0
        %333 = vmatmul.mubr.f32.gmra.mrb[0].mxu0 %v260
        %v334 = vpop.f32.mrb[0].mxu0
        %v335 = vadd.f32 0.0, %v334
        %v336 = vpop.f32.mrb[0].mxu0
        %v337 = vadd.f32 0.0, %v336
        %338 = vdwg.mxu0
        %339 = vst [vmem:[%s213] sm:$0xff] %v329
        %340 = vst [vmem:[%s213 + $0x8] sm:$0xff] %v331
        %341 = vst [vmem:[%s213 + $0x10] sm:$0xff] %v335
        %342 = vst [vmem:[%s213 + $0x18] sm:$0xff] %v337
        %s343 = sand.u32 %s123, 1
        %s344 = scalar_lea.sflag [#allocation3], %s343
        %s345 = sand.u32 %s123, 1
        %s346 = smul.addr %s345, 32
        %s347 = scalar_lea.vmem [#allocation2], %s346
        // Predicated region
        $region33: #{tpu_custom_call.1} parent=31 // pred_check
          %p348 = pneg %p133
        $region34: #{tpu_custom_call.1} parent=31 // pred_check_branch
          %350 = sbr.rel (%p348) target = $region36
        $region35: #{tpu_custom_call.1} parent=31 // pred_region
          %s351 = smul.u32 2, %s23
          %s352 = smul.u32 2, %s24
          %s354 = ssub.s32 512, 512
          %355 = vsyncadd %s344, %s354
          %s356 = smul.addr %s351, 2
          %s357 = sadd.s32 %s352, %s356
          %s358 = smul.addr %s22, 4
          %s359 = sadd.s32 %s357, %s358
          %s360 = smul.addr %s359, 128
          %s361 = scalar_lea.hbm %s3, %s360
          %s362 = sshll.u32 %s347, 4
          %s363 = int_to_ptr.vmem [resolvable:$true] %s362
          %368 = dma.vmem_to_hbm [thread:$0]  %s363, 512, %s361, %s344, 256, 256, 16
        $region36: #{tpu_custom_call.1} parent=31 // pred_fallthru
          _
      $region32: #{tpu_custom_call.1} parent=5 // pred_fallthru
        _
      %p369 = scmp.le.s32.totalorder 2, %s12
      // Predicated region
      $region37: #{tpu_custom_call.1} parent=5 // pred_check
        %p370 = pneg %p369
      $region38: #{tpu_custom_call.1} parent=5 // pred_check_branch
        %372 = sbr.rel (%p370) target = $region40
      $region39: #{tpu_custom_call.1} parent=5 // pred_region
        %s373 = ssub.s32 %s12, 2
        // Predicated region
        $region41: #{tpu_custom_call.1} parent=39 // pred_check
          %p374 = pneg %p139
        $region42: #{tpu_custom_call.1} parent=39 // pred_check_branch
          %376 = sbr.rel (%p374) target = $region44
        $region43: #{tpu_custom_call.1} parent=39 // pred_region
          %s377 = sand.u32 %s124, 1
          %s378 = scalar_lea.sflag [#allocation3], %s377
          %s379 = sand.u32 %s124, 1
          %s380 = smul.addr %s379, 32
          %s381 = scalar_lea.vmem [#allocation2], %s380
          %382 = dma.done %s378, 512
        $region44: #{tpu_custom_call.1} parent=39 // pred_fallthru
          _
      $region40: #{tpu_custom_call.1} parent=5 // pred_fallthru
        _
    $region6: #{tpu_custom_call.1} parent=1 // loop_footer
      %s16 = sadd.s32 1, %s12
    $region7: #{tpu_custom_call.1} parent=1 // loop_footer_branch
      %11 = sbr.rel target = $region3
    $region8: #{tpu_custom_call.1} parent=1 // loop_exit
      _
    %383 = vsyncpa [#allocation3], 1
    %s384 = scalar_lea.sflag [#allocation3], 1
    %385 = vsyncpa %s384, 1

// kernel: tpu_custom_call.1
$region0: #{tpu_custom_call.1}
  #allocation0 [shape = 'u32[]', space=smem, size = 0x4, offset = 0x4, fixed_abs, tag = 'smem constant byte address 0x4 - core index']
  #allocation1 [shape = 'u32[144,128]{1,0:T(1,128)}', space=vmem, size = 0x12000, scoped, tag = 'internal scratch']
  %s0 = inlined_call_operand.vmem [shape: f32[2,8,256], index: 0, kind: input, shape index: {}]
  %s1 = inlined_call_operand.vmem [shape: f32[2,8,1], index: 1, kind: input, shape index: {}]
  %s2 = inlined_call_operand.vmem [shape: f32[16,8], index: 2, kind: input, shape index: {}]
  %s3 = inlined_call_operand.hbm [shape: f32[2,16,256], index: 3, kind: output, shape index: {}]
  %s4 = sld [smem:[#allocation0]]
  $region45: #{tpu_custom_call.1} parent=0
    _
  %s6 = ssub.s32 1, %s4
  %s7 = scalar_select 0, %s6, %s4
  $region1: #{tpu_custom_call.1} parent=0
    #allocation2 [shape = 'u8[32768]{0}', space=vmem, size = 0x8000, scoped, tag = 'output window, operand 0']
    #allocation3 [shape = 's32[2]{0}', space=sflag, size = 0x8, scoped, tag = 'scoped memory for tpu_custom_call.1']
    %8 = vsyncpa [#allocation3], 0
    %s9 = scalar_lea.sflag [#allocation3], 1
    %10 = vsyncpa %s9, 0
    loop: start=0, step=1, limit=4
    $region2: #{tpu_custom_call.1} parent=1 // loop_pre_header
      _
    $region3: #{tpu_custom_call.1} parent=1 // loop_header
      %s12 = sphi 0, %s16
      %p13 = scmp.ge.s32.totalorder %s12, 4
      %s19 = sphi 0, %s38
      %s20 = sphi 0, %s34
      %s21 = sphi 0, %s30
      %s22 = sphi 0, %s19
      %s23 = sphi 0, %s20
      %s24 = sphi 0, %s21
      %s25 = sphi 0, %s22
      %s26 = sphi 0, %s23
      %s27 = sphi 0, %s24
      %s43 = sphi 0, %s45
      %s46 = sphi 0, %s43
      %s47 = sphi 0, %s46
      %s63 = sphi 0, %s47
      %s67 = sphi 0, %s67
      %s69 = sphi 0, %s67
      %s70 = sphi 0, %s69
      %s84 = sphi 0, %s70
      %s90 = sphi 0, %s92
      %s93 = sphi 0, %s90
      %s94 = sphi 0, %s93
      %s110 = sphi 0, %s94
      %s120 = sphi 0, %s122
      %s123 = sphi 0, %s120
      %s124 = sphi 0, %s123
      %s140 = sphi 0, %s124
    $region4: #{tpu_custom_call.1} parent=1 // loop_header_branch
      %15 = sbr.rel (%p13) target = $region8
    $region5: #{tpu_custom_call.1} parent=1 // loop_body
      %s17 = ssub.s32 %s12, 1
      %s18 = ssub.s32 %s12, 2
      %s28 = sadd.s32 1, %s21
      %p29 = scmp.ge.s32.totalorder %s28, 1
      %s30 = scalar_select %p29, 0, %s28
      %s31 = sadd.s32 1, %s20
      %s32 = scalar_select %p29, %s31, %s20
      %p33 = scmp.ge.s32.totalorder %s32, 1
      %s34 = scalar_select %p33, 0, %s32
      %s35 = sadd.s32 1, %s19
      %s36 = scalar_select %p33, %s35, %s19
      %p37 = scmp.ge.s32.totalorder %s36, 2
      %s38 = scalar_select %p37, 0, %s36
      %s39 = ssub.s32 %s19, %s38
      %s40 = ssub.s32 %s21, %s30
      %s41 = sor.u32 %s39, %s40
      %p42 = scmp.eq.s32.totalorder %s41, 0
      %s44 = sadd.s32 %s43, 1
      %s45 = scalar_select %p42, %s43, %s44
      %p48 = pneg %p42
      %p49 = scmp.eq.s32.totalorder %s12, 1
      %p50 = por %p48, %p49
      %p51 = scmp.ne.s32.totalorder %s43, %s46
      %p52 = scmp.eq.s32.totalorder %s12, 0
      %p53 = por %p51, %p52
      %p54 = scmp.ne.s32.totalorder %s43, %s46
      %p55 = scmp.eq.s32.totalorder %s17, 1
      %p56 = por %p54, %p55
      %p57 = scmp.ne.s32.totalorder %s46, %s47
      %p58 = scmp.eq.s32.totalorder %s17, 0
      %p59 = por %p57, %p58
      %p60 = scmp.ne.s32.totalorder %s46, %s47
      %p61 = scmp.eq.s32.totalorder %s18, 1
      %p62 = por %p60, %p61
      %p64 = scmp.ne.s32.totalorder %s47, %s63
      %p65 = scmp.eq.s32.totalorder %s18, 0
      %p66 = por %p64, %p65
      %s68 = sadd.s32 %s67, 1
      %p71 = scmp.eq.s32.totalorder %s12, 1
      %p72 = scmp.ne.s32.totalorder %s67, %s69
      %p73 = scmp.eq.s32.totalorder %s12, 0
      %p74 = por %p72, %p73
      %p75 = scmp.ne.s32.totalorder %s67, %s69
      %p76 = scmp.eq.s32.totalorder %s17, 1
      %p77 = por %p75, %p76
      %p78 = scmp.ne.s32.totalorder %s69, %s70
      %p79 = scmp.eq.s32.totalorder %s17, 0
      %p80 = por %p78, %p79
      %p81 = scmp.ne.s32.totalorder %s69, %s70
      %p82 = scmp.eq.s32.totalorder %s18, 1
      %p83 = por %p81, %p82
      %p85 = scmp.ne.s32.totalorder %s70, %s84
      %p86 = scmp.eq.s32.totalorder %s18, 0
      %p87 = por %p85, %p86
      %s88 = ssub.s32 %s20, %s34
      %p89 = scmp.eq.s32.totalorder %s88, 0
      %s91 = sadd.s32 %s90, 1
      %s92 = scalar_select %p89, %s90, %s91
      %p95 = pneg %p89
      %p96 = scmp.eq.s32.totalorder %s12, 1
      %p97 = por %p95, %p96
      %p98 = scmp.ne.s32.totalorder %s90, %s93
      %p99 = scmp.eq.s32.totalorder %s12, 0
      %p100 = por %p98, %p99
      %p101 = scmp.ne.s32.totalorder %s90, %s93
      %p102 = scmp.eq.s32.totalorder %s17, 1
      %p103 = por %p101, %p102
      %p104 = scmp.ne.s32.totalorder %s93, %s94
      %p105 = scmp.eq.s32.totalorder %s17, 0
      %p106 = por %p104, %p105
      %p107 = scmp.ne.s32.totalorder %s93, %s94
      %p108 = scmp.eq.s32.totalorder %s18, 1
      %p109 = por %p107, %p108
      %p111 = scmp.ne.s32.totalorder %s94, %s110
      %p112 = scmp.eq.s32.totalorder %s18, 0
      %p113 = por %p111, %p112
      %s114 = ssub.s32 %s19, %s38
      %s115 = ssub.s32 %s20, %s34
      %s116 = sor.u32 %s114, %s115
      %s117 = ssub.s32 %s21, %s30
      %s118 = sor.u32 %s116, %s117
      %p119 = scmp.eq.s32.totalorder %s118, 0
      %s121 = sadd.s32 %s120, 1
      %s122 = scalar_select %p119, %s120, %s121
      %p125 = pneg %p119
      %p126 = scmp.eq.s32.totalorder %s12, 1
      %p127 = por %p125, %p126
      %p128 = scmp.ne.s32.totalorder %s120, %s123
      %p129 = scmp.eq.s32.totalorder %s12, 0
      %p130 = por %p128, %p129
      %p131 = scmp.ne.s32.totalorder %s120, %s123
      %p132 = scmp.eq.s32.totalorder %s17, 1
      %p133 = por %p131, %p132
      %p134 = scmp.ne.s32.totalorder %s123, %s124
      %p135 = scmp.eq.s32.totalorder %s17, 0
      %p136 = por %p134, %p135
      %p137 = scmp.ne.s32.totalorder %s123, %s124
      %p138 = scmp.eq.s32.totalorder %s18, 1
      %p139 = por %p137, %p138
      %p141 = scmp.ne.s32.totalorder %s124, %s140
      %p142 = scmp.eq.s32.totalorder %s18, 0
      %p143 = por %p141, %p142
      %p144 = scmp.le.s32.totalorder 1, %s12
      %p145 = scmp.lt.s32.totalorder %s12, 3
      %p146 = pnand %p144, %p145
      %p147 = pneg %p146
      // Predicated region
      $region9: #{tpu_custom_call.1} parent=5 // pred_check
        _
      $region10: #{tpu_custom_call.1} parent=5 // pred_check_branch
        %149 = sbr.rel (%p146) target = $region12
      $region11: #{tpu_custom_call.1} parent=5 // pred_region
        %s150 = ssub.s32 %s12, 1
        // Predicated region
        $region13: #{tpu_custom_call.1} parent=11 // pred_check
          %p151 = pneg %p80
        $region14: #{tpu_custom_call.1} parent=11 // pred_check_branch
          %153 = sbr.rel (%p151) target = $region16
        $region15: #{tpu_custom_call.1} parent=11 // pred_region
          _
        $region16: #{tpu_custom_call.1} parent=11 // pred_fallthru
          _
        // Predicated region
        $region17: #{tpu_custom_call.1} parent=11 // pred_check
          %p154 = pneg %p106
        $region18: #{tpu_custom_call.1} parent=11 // pred_check_branch
          %156 = sbr.rel (%p154) target = $region20
        $region19: #{tpu_custom_call.1} parent=11 // pred_region
          %s157 = smul.u32 2, %s23
          %p158 = scmp.lt.s32.totalorder %s157, 1
          %s159 = scalar_select %p158, %s157, 1
          %s160 = smul.addr %s159, 8
          %s161 = scalar_lea.vmem %s2, %s160
          %s162 = smul.u32 2, %s23
        $region20: #{tpu_custom_call.1} parent=11 // pred_fallthru
          _
      $region12: #{tpu_custom_call.1} parent=5 // pred_fallthru
        _
      %p163 = scmp.lt.s32.totalorder %s12, 2
      // Predicated region
      $region21: #{tpu_custom_call.1} parent=5 // pred_check
        %p164 = pneg %p163
      $region22: #{tpu_custom_call.1} parent=5 // pred_check_branch
        %166 = sbr.rel (%p164) target = $region24
      $region23: #{tpu_custom_call.1} parent=5 // pred_region
        // Predicated region
        $region25: #{tpu_custom_call.1} parent=23 // pred_check
          %p167 = pneg %p53
        $region26: #{tpu_custom_call.1} parent=23 // pred_check_branch
          %169 = sbr.rel (%p167) target = $region28
        $region27: #{tpu_custom_call.1} parent=23 // pred_region
          %s170 = smul.u32 2, %s21
          %p171 = scmp.lt.s32.totalorder %s19, 1
          %s172 = scalar_select %p171, %s19, 1
          %p173 = scmp.lt.s32.totalorder %s170, 1
          %s174 = scalar_select %p173, %s170, 1
          %s175 = smul.addr %s172, 2
          %s176 = sadd.s32 %s174, %s175
          %s177 = smul.addr %s176, 8
          %s178 = scalar_lea.vmem %s0, %s177
          %s179 = smul.u32 2, %s21
        $region28: #{tpu_custom_call.1} parent=23 // pred_fallthru
          _
      $region24: #{tpu_custom_call.1} parent=5 // pred_fallthru
        _
      %p180 = scmp.le.s32.totalorder 1, %s12
      %p181 = scmp.lt.s32.totalorder %s12, 3
      %p182 = pnand %p180, %p181
      %p183 = pneg %p182
      // Predicated region
      $region29: #{tpu_custom_call.1} parent=5 // pred_check
        _
      $region30: #{tpu_custom_call.1} parent=5 // pred_check_branch
        %185 = sbr.rel (%p182) target = $region32
      $region31: #{tpu_custom_call.1} parent=5 // pred_region
        %s186 = ssub.s32 %s12, 1
        %s187 = smul.u32 2, %s24
        %p188 = scmp.lt.s32.totalorder %s22, 1
        %s189 = scalar_select %p188, %s22, 1
        %p190 = scmp.lt.s32.totalorder %s187, 1
        %s191 = scalar_select %p190, %s187, 1
        %s192 = smul.addr %s189, 2
        %s193 = sadd.s32 %s191, %s192
        %s194 = smul.addr %s193, 8
        %s195 = scalar_lea.vmem %s0, %s194
        %p196 = pneg %p59
        %p197 = pneg %p56
        %p198 = pneg %p80
        %p199 = pneg %p77
        %s200 = smul.u32 2, %s23
        %p201 = scmp.lt.s32.totalorder %s200, 1
        %s202 = scalar_select %p201, %s200, 1
        %s203 = smul.addr %s202, 8
        %s204 = scalar_lea.vmem %s2, %s203
        %p205 = pneg %p106
        %p206 = pneg %p103
        %p207 = pneg %p136
        %p208 = pneg %p133
        %s209 = sand.u32 %s123, 1
        %s210 = scalar_lea.sflag [#allocation3], %s209
        %s211 = sand.u32 %s123, 1
        %s212 = smul.addr %s211, 32
        %s213 = scalar_lea.vmem [#allocation2], %s212
        %s214 = smul.u32 2, %s24
        %p215 = scmp.lt.s32.totalorder %s22, 1
        %s216 = scalar_select %p215, %s22, 1
        %p217 = scmp.lt.s32.totalorder %s214, 1
        %s218 = scalar_select %p217, %s214, 1
        %s219 = smul.addr %s216, 2
        %s220 = sadd.s32 %s218, %s219
        %s221 = smul.addr %s220, 8
        %s222 = scalar_lea.vmem %s0, %s221
        %s223 = smul.u32 2, %s24
        %s224 = smul.u32 2, %s23
        %p225 = scmp.lt.s32.totalorder %s224, 1
        %s226 = scalar_select %p225, %s224, 1
        %s227 = smul.addr %s226, 8
        %s228 = scalar_lea.vmem %s2, %s227
        %s229 = smul.u32 2, %s23
        %s230 = smul.u32 2, %s23
        %s231 = smul.u32 2, %s24
        %v232 = vld [vmem:[%s1] sm:$0xff]
        %s233 = scalar_lea.vmem %s1, 8
        %v234 = vld [vmem:[%s233] sm:$0xff]
        %v235 = vld [vmem:[%s222] sm:$0xff]
        %v236 = vld [vmem:[%s222 + $0x8] sm:$0xff]
        %238 = vset.pattern.permute.xlu0 0
        %239 = vperm.xlu0 %238, %v232
        %v240 = vpop.permute.xlu0 %239
        %v242 = vmul.f32 %v235, %v240
        %v243 = vmul.f32 %v236, %v240
        %245 = vset.pattern.permute.xlu0 0
        %246 = vperm.xlu0 %245, %v234
        %v247 = vpop.permute.xlu0 %246
        %v249 = vadd.f32 %v242, %v247
        %v250 = vadd.f32 %v243, %v247
        %v251 = vmax.f32 %v249, 0.0
        %v252 = vmax.f32 %v250, 0.0
        %v253 = vld [vmem:[%s228] sm:$0xff]
        %v254 = vld [vmem:[%s228 + $0x8] sm:$0xff]
        %vm255 = vcmask 64512
        %v257 = vsel %vm255, %v253, 0
        %v260 = vsel %vm255, %v254, 0
        %262 = vmatprep.subr.mxu0 %v252
        %263 = vmatpush1.msra.mxu0 %v251
        %264 = vmatprep.subr.mxu0 0.0
        %265 = vmatpush1.msra.mxu0 0.0
        %266 = vmatprep.subr.mxu0 0.0
        %267 = vmatpush1.msra.mxu0 0.0
        %268 = vmatprep.subr.mxu0 0.0
        %269 = vmatpush1.msra.mxu0 0.0
        %270 = vmatprep.subr.mxu0 0.0
        %271 = vmatpush1.msra.mxu0 0.0
        %272 = vmatprep.subr.mxu0 0.0
        %273 = vmatpush1.msra.mxu0 0.0
        %274 = vmatprep.subr.mxu0 0.0
        %275 = vmatpush1.msra.mxu0 0.0
        %276 = vmatprep.subr.mxu0 0.0
        %277 = vmatpush1.msra.mxu0 0.0
        %278 = vmatprep.subr.mxu0 0.0
        %279 = vmatpush1.msra.mxu0 0.0
        %280 = vmatprep.subr.mxu0 0.0
        %281 = vmatpush1.msra.mxu0 0.0
        %282 = vmatprep.subr.mxu0 0.0
        %283 = vmatpush1.msra.mxu0 0.0
        %284 = vmatprep.subr.mxu0 0.0
        %285 = vmatpush1.msra.mxu0 0.0
        %286 = vmatprep.subr.mxu0 0.0
        %287 = vmatpush1.msra.mxu0 0.0
        %288 = vmatprep.subr.mxu0 0.0
        %289 = vmatpush1.msra.mxu0 0.0
        %290 = vmatprep.subr.mxu0 0.0
        %291 = vmatpush1.msra.mxu0 0.0
        %292 = vmatprep.subr.mxu0 0.0
        %293 = vmatpush1.msra.mxu0 0.0
        %294 = vmatprep.subr.mxu0 0.0
        %295 = vmatpush1.msra.mxu0 0.0
        %296 = vmatprep.subr.mxu0 0.0
        %297 = vmatpush1.msra.mxu0 0.0
        %298 = vmatprep.subr.mxu0 0.0
        %299 = vmatpush1.msra.mxu0 0.0
        %300 = vmatprep.subr.mxu0 0.0
        %301 = vmatpush1.msra.mxu0 0.0
        %302 = vmatprep.subr.mxu0 0.0
        %303 = vmatpush1.msra.mxu0 0.0
        %304 = vmatprep.subr.mxu0 0.0
        %305 = vmatpush1.msra.mxu0 0.0
        %306 = vmatprep.subr.mxu0 0.0
        %307 = vmatpush1.msra.mxu0 0.0
        %308 = vmatprep.subr.mxu0 0.0
        %309 = vmatpush1.msra.mxu0 0.0
        %310 = vmatprep.subr.mxu0 0.0
        %311 = vmatpush1.msra.mxu0 0.0
        %312 = vmatprep.subr.mxu0 0.0
        %313 = vmatpush1.msra.mxu0 0.0
        %314 = vmatprep.subr.mxu0 0.0
        %315 = vmatpush1.msra.mxu0 0.0
        %316 = vmatprep.subr.mxu0 0.0
        %317 = vmatpush1.msra.mxu0 0.0
        %318 = vmatprep.subr.mxu0 0.0
        %319 = vmatpush1.msra.mxu0 0.0
        %320 = vmatprep.subr.mxu0 0.0
        %321 = vmatpush1.msra.mxu0 0.0
        %322 = vmatprep.subr.mxu0 0.0
        %323 = vmatpush1.msra.mxu0 0.0
        %324 = vmatprep.subr.mxu0 0.0
        %325 = vmatpush1.msra.mxu0 0.0
        %326 = vmatprep.mubr.f32.mxu0 0.0
        %327 = vmatmul.mubr.f32.gmra.mrb[0].mxu0 %v257
        %v328 = vpop.f32.mrb[0].mxu0
        %v329 = vadd.f32 0.0, %v328
        %v330 = vpop.f32.mrb[0].mxu0
        %v331 = vadd.f32 0.0, %v330
        %332 = vmatprep.mubr.f32.mxu0 0.0
        %333 = vmatmul.mubr.f32.gmra.mrb[0].mxu0 %v260
        %v334 = vpop.f32.mrb[0].mxu0
        %v335 = vadd.f32 0.0, %v334
        %v336 = vpop.f32.mrb[0].mxu0
        %v337 = vadd.f32 0.0, %v336
        %338 = vdwg.mxu0
        %339 = vst [vmem:[%s213] sm:$0xff] %v329
        %340 = vst [vmem:[%s213 + $0x8] sm:$0xff] %v331
        %341 = vst [vmem:[%s213 + $0x10] sm:$0xff] %v335
        %342 = vst [vmem:[%s213 + $0x18] sm:$0xff] %v337
        %s343 = sand.u32 %s123, 1
        %s344 = scalar_lea.sflag [#allocation3], %s343
        %s345 = sand.u32 %s123, 1
        %s346 = smul.addr %s345, 32
        %s347 = scalar_lea.vmem [#allocation2], %s346
        // Predicated region
        $region33: #{tpu_custom_call.1} parent=31 // pred_check
          %p348 = pneg %p133
        $region34: #{tpu_custom_call.1} parent=31 // pred_check_branch
          %350 = sbr.rel (%p348) target = $region36
        $region35: #{tpu_custom_call.1} parent=31 // pred_region
          %s351 = smul.u32 2, %s23
          %s352 = smul.u32 2, %s24
          %s354 = ssub.s32 512, 512
          %355 = vsyncadd %s344, %s354
          %s356 = smul.addr %s351, 2
          %s357 = sadd.s32 %s352, %s356
          %s358 = smul.addr %s22, 4
          %s359 = sadd.s32 %s357, %s358
          %s360 = smul.addr %s359, 128
          %s361 = scalar_lea.hbm %s3, %s360
          %s362 = sshll.u32 %s347, 4
          %s363 = int_to_ptr.vmem [resolvable:$true] %s362
          %368 = dma.vmem_to_hbm [thread:$0]  %s363, 512, %s361, %s344, 256, 256, 16
        $region36: #{tpu_custom_call.1} parent=31 // pred_fallthru
          _
      $region32: #{tpu_custom_call.1} parent=5 // pred_fallthru
        _
      %p369 = scmp.le.s32.totalorder 2, %s12
      // Predicated region
      $region37: #{tpu_custom_call.1} parent=5 // pred_check
        %p370 = pneg %p369
      $region38: #{tpu_custom_call.1} parent=5 // pred_check_branch
        %372 = sbr.rel (%p370) target = $region40
      $region39: #{tpu_custom_call.1} parent=5 // pred_region
        %s373 = ssub.s32 %s12, 2
        // Predicated region
        $region41: #{tpu_custom_call.1} parent=39 // pred_check
          %p374 = pneg %p139
        $region42: #{tpu_custom_call.1} parent=39 // pred_check_branch
          %376 = sbr.rel (%p374) target = $region44
        $region43: #{tpu_custom_call.1} parent=39 // pred_region
          %s377 = sand.u32 %s124, 1
          %s378 = scalar_lea.sflag [#allocation3], %s377
          %s379 = sand.u32 %s124, 1
          %s380 = smul.addr %s379, 32
          %s381 = scalar_lea.vmem [#allocation2], %s380
          %382 = dma.done %s378, 512
        $region44: #{tpu_custom_call.1} parent=39 // pred_fallthru
          _
      $region40: #{tpu_custom_call.1} parent=5 // pred_fallthru
        _
    $region6: #{tpu_custom_call.1} parent=1 // loop_footer
      %s16 = sadd.s32 1, %s12
    $region7: #{tpu_custom_call.1} parent=1 // loop_footer_branch
      %11 = sbr.rel target = $region3
    $region8: #{tpu_custom_call.1} parent=1 // loop_exit
      _
    %383 = vsyncpa [#allocation3], 1
    %s384 = scalar_lea.sflag [#allocation3], 1
    %385 = vsyncpa %s384, 1

</llo_original>
